<compile_context>
chip_gen: v5e
topology: v5e:2x2
jax: 0.10.0
libtpu: 0.0.40
codegen_flags: <defaults>
</compile_context>

<pallas_src>
import functools

import jax
import jax.numpy as jnp
from jax.experimental import pallas as pl
from jax.experimental.pallas import tpu as pltpu


# ----------------------------------------------------------------------------
# Parameter setup (mirrors quadratic_spline.__init__)
# ----------------------------------------------------------------------------
def spline_grid_from_range(spline_size, spline_range, round_to=1e-6):
    if int(spline_size) % 2 == 0:
        raise TypeError("size should be an odd number.")
    if float(spline_range) <= 0:
        raise TypeError("spline_range needs to be a positive float...")
    return float(spline_range) / (int(spline_size) // 2) // round_to * round_to


def _round_up(v, m):
    return -(-v // m) * m


def _choose_tile(dim, unit, cap, pad_slack=0.30):
    """Pick a tile (multiple of `unit`, <= cap) for a dimension of size `dim`.

    Prefers the largest tile (fewer grid steps, lane-dense stores) whose padded
    total stays within `pad_slack` of the minimum achievable padding, so
    awkward sizes neither fall back to tiny 128-lane tiles nor blow up the
    padded work.  Returns (tile, padded_dim) with padded_dim % tile == 0.
    """
    dim_u = _round_up(max(int(dim), 1), unit)
    cap_u = max(unit, (int(cap) // unit) * unit)
    max_tile = min(cap_u, dim_u)
    candidates = list(range(unit, max_tile + 1, unit))
    padded = {t: _round_up(dim_u, t) for t in candidates}
    min_padded = min(padded.values())
    budget = min_padded * (1.0 + pad_slack)
    tile = max(t for t in candidates if padded[t] <= budget)
    return tile, padded[tile]


# ----------------------------------------------------------------------------
# Pallas kernel: quadratic B-spline activation (select-gather + Horner)
# ----------------------------------------------------------------------------
def quadratic_spline_kernel(x_ref, a_ref, b_ref, q_ref, out_ref, *,
                            grid_step, inv_step, n_knots):
    # x_ref:              (row_tile, lane_tile) f32 -- rows = flattened (batch, channel)
    # a_ref/b_ref/q_ref:  (row_tile, n_knots-2) f32 -- per-row polynomial tables
    x = x_ref[...]
    a_tab = a_ref[...]
    b_tab = b_ref[...]
    q_tab = q_ref[...]

    half = n_knots // 2
    n_valid = n_knots - 2                     # local_idx in [0, n_knots - 3]
    lo = -(grid_step * half)
    hi = grid_step * (half - 2)

    # Floor path keeps the true division so the integer index is bit-compatible
    # with the reference at the clamp boundaries.
    x_clamped = jnp.clip(x, lo, hi)
    floored_x = jnp.floor(x_clamped / grid_step)
    local_idx = (floored_x + half).astype(jnp.int32)
    local_idx = jnp.clip(local_idx, 0, n_valid - 1)   # deterministic at fp edges

    # shift1 uses the *unclamped* x (exactly as in the PyTorch code); the second
    # divide is replaced by a reciprocal multiply (bit-identical for power-of-two
    # grid steps such as 0.5 here).
    s = (x - floored_x * grid_step) * inv_step

    # Select-gather: pick the per-element quadratic coefficients from the
    # per-row tables with an unrolled compare+select sweep (pure vsel work).
    a_sel = jnp.broadcast_to(a_tab[:, 0:1], x.shape)
    b_sel = jnp.broadcast_to(b_tab[:, 0:1], x.shape)
    q_sel = jnp.broadcast_to(q_tab[:, 0:1], x.shape)
    for v in range(1, n_valid):
        eq = local_idx == v
        a_sel = jnp.where(eq, a_tab[:, v:v + 1], a_sel)
        b_sel = jnp.where(eq, b_tab[:, v:v + 1], b_sel)
        q_sel = jnp.where(eq, q_tab[:, v:v + 1], q_sel)

    # Horner:  Q*s^2 + B*s + A  ==  c[v]*frac1 + c[v+1]*frac2 + c[v+2]*frac3
    out_ref[...] = ((q_sel * s + b_sel) * s + a_sel).astype(out_ref.dtype)


# ----------------------------------------------------------------------------
# Wrapper (glue: pure reshapes + padding, no transposes)
# ----------------------------------------------------------------------------
def quadratic_spline_forward(x_nchw, coefficients, grid_step, n_knots,
                             lane_tile_cap=4096, row_tile_cap=64):
    B, C, H, W = x_nchw.shape
    n_knots = int(n_knots)
    n_valid = n_knots - 2
    assert coefficients.shape == (C, n_knots)
    R, S = B * C, H * W

    # NCHW is contiguous as (B*C, H*W): pure reshape, no transpose / extra HBM pass.
    x2d = x_nchw.reshape(R, S)

    # Choose large, lane-dense tiles first; pad the array up to tile multiples.
    row_tile, R_pad = _choose_tile(R, 8, row_tile_cap)
    lane_tile, S_pad = _choose_tile(S, 128, lane_tile_cap)

    # v7x has 2 TensorCores: if everything fits in one tile but carries
    # non-trivial work, split a parallel axis so both cores get a grid step.
    if (R_pad // row_tile) * (S_pad // lane_tile) == 1 and R_pad * S_pad * 4 > (1 << 20):
        if S_pad >= 256:
            lane_tile = max(128, ((S_pad // 2) // 128) * 128)
            S_pad = _round_up(S, lane_tile)
        elif R_pad >= 16:
            row_tile = max(8, ((R_pad // 2) // 8) * 8)
            R_pad = _round_up(R, row_tile)

    if (R_pad, S_pad) != (R, S):
        x2d = jnp.pad(x2d, ((0, R_pad - R), (0, S_pad - S)))

    # Per-channel quadratic-polynomial tables, expanded to one row per (batch,
    # channel) pair (tiny, built once; padded rows reuse a valid channel).
    c_ch = coefficients.astype(x2d.dtype)            # (C, n_knots)
    c0 = c_ch[:, 0:n_valid]
    c1 = c_ch[:, 1:n_valid + 1]
    c2 = c_ch[:, 2:n_valid + 2]
    a_ch = 0.5 * (c0 + c1)
    b_ch = c1 - c0
    q_ch = 0.5 * (c0 - 2.0 * c1 + c2)

    row_chan = jnp.arange(R_pad, dtype=jnp.int32) % C
    a_rows = jnp.take(a_ch, row_chan, axis=0)
    b_rows = jnp.take(b_ch, row_chan, axis=0)
    q_rows = jnp.take(q_ch, row_chan, axis=0)

    kernel = functools.partial(
        quadratic_spline_kernel,
        grid_step=float(grid_step),
        inv_step=1.0 / float(grid_step),
        n_knots=n_knots)

    out2d = pl.pallas_call(
        kernel,
        out_shape=jax.ShapeDtypeStruct((R_pad, S_pad), x2d.dtype),
        grid=(R_pad // row_tile, S_pad // lane_tile),
        in_specs=[
            pl.BlockSpec((row_tile, lane_tile), lambda i, j: (i, j)),   # x tile
            pl.BlockSpec((row_tile, n_valid), lambda i, j: (i, 0)),     # A table
            pl.BlockSpec((row_tile, n_valid), lambda i, j: (i, 0)),     # B table
            pl.BlockSpec((row_tile, n_valid), lambda i, j: (i, 0)),     # Q table
        ],
        out_specs=pl.BlockSpec((row_tile, lane_tile), lambda i, j: (i, j)),
        compiler_params=pltpu.CompilerParams(
            dimension_semantics=("parallel", "parallel")),
    )(x2d, a_rows, b_rows, q_rows)

    return out2d[:R, :S].reshape(B, C, H, W)


# ----------------------------------------------------------------------------
# Pure-JAX reference (direct transcription of Quadratic_Spline_Func.forward)
# ----------------------------------------------------------------------------
def quadratic_spline_reference(x, coefficients, grid_step, n_knots):
    C = coefficients.shape[0]
    coeff_vect = coefficients.reshape(-1)
    zero_knot = jnp.arange(C, dtype=jnp.int32) * n_knots + n_knots // 2
    half = n_knots // 2
    x_clamped = jnp.clip(x, -(grid_step * half), grid_step * (half - 2))
    floored = jnp.floor(x_clamped / grid_step)
    idx = (zero_knot.reshape(1, -1, 1, 1) + floored).astype(jnp.int32)
    shift1 = (x - floored * grid_step) / grid_step
    frac1 = (shift1 - 1.0) ** 2 / 2.0
    frac2 = (-2.0 * shift1 ** 2 + 2.0 * shift1 + 1.0) / 2.0
    frac3 = shift1 ** 2 / 2.0
    return (coeff_vect[idx + 2] * frac3
            + coeff_vect[idx + 1] * frac2
            + coeff_vect[idx] * frac1)


if __name__ == "__main__":
    # Module hyper-params: n_channels=4, n_knots=17 (odd), one-sided range T=4.0
    n_channels, n_knots, T_range = 4, 17, 4.0
    grid_step = spline_grid_from_range(n_knots, T_range)

    B, H, W = 2, 16, 16
    key = jax.random.PRNGKey(0)
    x = jax.random.normal(key, (B, n_channels, H, W), dtype=jnp.float32) * 3.0

    # The module initialises coefficients to zeros (output would be trivially 0);
    # use a deterministic non-zero ramp (identity-like spline, per-channel scale)
    # so the kernel is actually exercised.
    knot_pos = (jnp.arange(n_knots, dtype=jnp.float32) - n_knots // 2) * grid_step
    chan_scale = 1.0 + 0.25 * jnp.arange(n_channels, dtype=jnp.float32)
    coefficients = (chan_scale[:, None] * knot_pos[None, :]).astype(jnp.float32)

    out = quadratic_spline_forward(x, coefficients, grid_step, n_knots)
    out = jax.block_until_ready(out)

    ref = quadratic_spline_reference(x, coefficients, grid_step, n_knots)
    assert out.shape == x.shape and out.dtype == x.dtype
    assert jnp.allclose(out, ref, atol=1e-5, rtol=1e-5), "mismatch vs reference"

    # TODO(synk): backward pass (scatter_add into the coefficient table) not
    # implemented; this kernel reproduces the forward semantics only.
    print("KERNEL_OK")
</pallas_src>

<mosaic_0001>
module attributes {stable_mosaic.version = 11 : i64} {
  func.func @quadratic_spline_kernel(%arg0: i32, %arg1: i32, %arg2: memref<8x256xf32, #tpu.memory_space<vmem>>, %arg3: memref<8x15xf32, #tpu.memory_space<vmem>>, %arg4: memref<8x15xf32, #tpu.memory_space<vmem>>, %arg5: memref<8x15xf32, #tpu.memory_space<vmem>>, %arg6: memref<8x256xf32, #tpu.memory_space<vmem>>) attributes {dimension_semantics = [#tpu.dimension_semantics<parallel>, #tpu.dimension_semantics<parallel>], iteration_bounds = array<i64: 1, 1>, scalar_prefetch = 0 : i64, scratch_operands = 0 : i64, tpu.core_type = #tpu.core_type<tc>, window_params = [{transform_indices = @transform_0, window_bounds = array<i64: 8, 256>}, {transform_indices = @transform_1, window_bounds = array<i64: 8, 15>}, {transform_indices = @transform_2, window_bounds = array<i64: 8, 15>}, {transform_indices = @transform_3, window_bounds = array<i64: 8, 15>}, {transform_indices = @transform_4, window_bounds = array<i64: 8, 256>}]} {
    %c0 = arith.constant 0 : index
    %c0_0 = arith.constant 0 : index
    %0 = vector.load %arg2[%c0, %c0_0] : memref<8x256xf32, #tpu.memory_space<vmem>>, vector<8x256xf32>
    %c0_1 = arith.constant 0 : index
    %c0_2 = arith.constant 0 : index
    %1 = vector.load %arg3[%c0_1, %c0_2] : memref<8x15xf32, #tpu.memory_space<vmem>>, vector<8x15xf32>
    %c0_3 = arith.constant 0 : index
    %c0_4 = arith.constant 0 : index
    %2 = vector.load %arg4[%c0_3, %c0_4] : memref<8x15xf32, #tpu.memory_space<vmem>>, vector<8x15xf32>
    %c0_5 = arith.constant 0 : index
    %c0_6 = arith.constant 0 : index
    %3 = vector.load %arg5[%c0_5, %c0_6] : memref<8x15xf32, #tpu.memory_space<vmem>>, vector<8x15xf32>
    %cst = arith.constant -4.000000e+00 : f32
    %cst_7 = arith.constant 3.000000e+00 : f32
    %4 = vector.broadcast %cst : f32 to vector<8x256xf32>
    %5 = arith.maximumf %4, %0 : vector<8x256xf32>
    %6 = vector.broadcast %cst_7 : f32 to vector<8x256xf32>
    %7 = arith.minimumf %6, %5 : vector<8x256xf32>
    %cst_8 = arith.constant 5.000000e-01 : f32
    %8 = vector.broadcast %cst_8 : f32 to vector<8x256xf32>
    %9 = arith.divf %7, %8 : vector<8x256xf32>
    %10 = math.floor %9 : vector<8x256xf32>
    %cst_9 = arith.constant 8.000000e+00 : f32
    %11 = vector.broadcast %cst_9 : f32 to vector<8x256xf32>
    %12 = arith.addf %10, %11 : vector<8x256xf32>
    %13 = arith.fptosi %12 : vector<8x256xf32> to vector<8x256xi32>
    %c0_i32 = arith.constant 0 : i32
    %c14_i32 = arith.constant 14 : i32
    %14 = vector.broadcast %c0_i32 : i32 to vector<8x256xi32>
    %15 = arith.maxsi %14, %13 : vector<8x256xi32>
    %16 = vector.broadcast %c14_i32 : i32 to vector<8x256xi32>
    %17 = arith.minsi %16, %15 : vector<8x256xi32>
    %cst_10 = arith.constant 5.000000e-01 : f32
    %18 = vector.broadcast %cst_10 : f32 to vector<8x256xf32>
    %19 = arith.mulf %10, %18 : vector<8x256xf32>
    %20 = arith.subf %0, %19 : vector<8x256xf32>
    %cst_11 = arith.constant 2.000000e+00 : f32
    %21 = vector.broadcast %cst_11 : f32 to vector<8x256xf32>
    %22 = arith.mulf %20, %21 : vector<8x256xf32>
    %23 = vector.extract_strided_slice %1 {offsets = [0, 0], sizes = [8, 1], strides = [1, 1]} : vector<8x15xf32> to vector<8x1xf32>
    %24 = vector.shape_cast %23 : vector<8x1xf32> to vector<8x1xf32>
    %25 = vector.broadcast %24 : vector<8x1xf32> to vector<8x256xf32>
    %26 = vector.extract_strided_slice %2 {offsets = [0, 0], sizes = [8, 1], strides = [1, 1]} : vector<8x15xf32> to vector<8x1xf32>
    %27 = vector.shape_cast %26 : vector<8x1xf32> to vector<8x1xf32>
    %28 = vector.broadcast %27 : vector<8x1xf32> to vector<8x256xf32>
    %29 = vector.extract_strided_slice %3 {offsets = [0, 0], sizes = [8, 1], strides = [1, 1]} : vector<8x15xf32> to vector<8x1xf32>
    %30 = vector.shape_cast %29 : vector<8x1xf32> to vector<8x1xf32>
    %31 = vector.broadcast %30 : vector<8x1xf32> to vector<8x256xf32>
    %c1_i32 = arith.constant 1 : i32
    %32 = vector.broadcast %c1_i32 : i32 to vector<8x256xi32>
    %33 = arith.cmpi eq, %17, %32 : vector<8x256xi32>
    %34 = vector.extract_strided_slice %1 {offsets = [0, 1], sizes = [8, 1], strides = [1, 1]} : vector<8x15xf32> to vector<8x1xf32>
    %35 = vector.shape_cast %34 : vector<8x1xf32> to vector<8x1xf32>
    %36 = vector.broadcast %35 : vector<8x1xf32> to vector<8x256xf32>
    %37 = arith.select %33, %36, %25 : vector<8x256xi1>, vector<8x256xf32>
    %38 = vector.extract_strided_slice %2 {offsets = [0, 1], sizes = [8, 1], strides = [1, 1]} : vector<8x15xf32> to vector<8x1xf32>
    %39 = vector.shape_cast %38 : vector<8x1xf32> to vector<8x1xf32>
    %40 = vector.broadcast %39 : vector<8x1xf32> to vector<8x256xf32>
    %41 = arith.select %33, %40, %28 : vector<8x256xi1>, vector<8x256xf32>
    %42 = vector.extract_strided_slice %3 {offsets = [0, 1], sizes = [8, 1], strides = [1, 1]} : vector<8x15xf32> to vector<8x1xf32>
    %43 = vector.shape_cast %42 : vector<8x1xf32> to vector<8x1xf32>
    %44 = vector.broadcast %43 : vector<8x1xf32> to vector<8x256xf32>
    %45 = arith.select %33, %44, %31 : vector<8x256xi1>, vector<8x256xf32>
    %c2_i32 = arith.constant 2 : i32
    %46 = vector.broadcast %c2_i32 : i32 to vector<8x256xi32>
    %47 = arith.cmpi eq, %17, %46 : vector<8x256xi32>
    %48 = vector.extract_strided_slice %1 {offsets = [0, 2], sizes = [8, 1], strides = [1, 1]} : vector<8x15xf32> to vector<8x1xf32>
    %49 = vector.shape_cast %48 : vector<8x1xf32> to vector<8x1xf32>
    %50 = vector.broadcast %49 : vector<8x1xf32> to vector<8x256xf32>
    %51 = arith.select %47, %50, %37 : vector<8x256xi1>, vector<8x256xf32>
    %52 = vector.extract_strided_slice %2 {offsets = [0, 2], sizes = [8, 1], strides = [1, 1]} : vector<8x15xf32> to vector<8x1xf32>
    %53 = vector.shape_cast %52 : vector<8x1xf32> to vector<8x1xf32>
    %54 = vector.broadcast %53 : vector<8x1xf32> to vector<8x256xf32>
    %55 = arith.select %47, %54, %41 : vector<8x256xi1>, vector<8x256xf32>
    %56 = vector.extract_strided_slice %3 {offsets = [0, 2], sizes = [8, 1], strides = [1, 1]} : vector<8x15xf32> to vector<8x1xf32>
    %57 = vector.shape_cast %56 : vector<8x1xf32> to vector<8x1xf32>
    %58 = vector.broadcast %57 : vector<8x1xf32> to vector<8x256xf32>
    %59 = arith.select %47, %58, %45 : vector<8x256xi1>, vector<8x256xf32>
    %c3_i32 = arith.constant 3 : i32
    %60 = vector.broadcast %c3_i32 : i32 to vector<8x256xi32>
    %61 = arith.cmpi eq, %17, %60 : vector<8x256xi32>
    %62 = vector.extract_strided_slice %1 {offsets = [0, 3], sizes = [8, 1], strides = [1, 1]} : vector<8x15xf32> to vector<8x1xf32>
    %63 = vector.shape_cast %62 : vector<8x1xf32> to vector<8x1xf32>
    %64 = vector.broadcast %63 : vector<8x1xf32> to vector<8x256xf32>
    %65 = arith.select %61, %64, %51 : vector<8x256xi1>, vector<8x256xf32>
    %66 = vector.extract_strided_slice %2 {offsets = [0, 3], sizes = [8, 1], strides = [1, 1]} : vector<8x15xf32> to vector<8x1xf32>
    %67 = vector.shape_cast %66 : vector<8x1xf32> to vector<8x1xf32>
    %68 = vector.broadcast %67 : vector<8x1xf32> to vector<8x256xf32>
    %69 = arith.select %61, %68, %55 : vector<8x256xi1>, vector<8x256xf32>
    %70 = vector.extract_strided_slice %3 {offsets = [0, 3], sizes = [8, 1], strides = [1, 1]} : vector<8x15xf32> to vector<8x1xf32>
    %71 = vector.shape_cast %70 : vector<8x1xf32> to vector<8x1xf32>
    %72 = vector.broadcast %71 : vector<8x1xf32> to vector<8x256xf32>
    %73 = arith.select %61, %72, %59 : vector<8x256xi1>, vector<8x256xf32>
    %c4_i32 = arith.constant 4 : i32
    %74 = vector.broadcast %c4_i32 : i32 to vector<8x256xi32>
    %75 = arith.cmpi eq, %17, %74 : vector<8x256xi32>
    %76 = vector.extract_strided_slice %1 {offsets = [0, 4], sizes = [8, 1], strides = [1, 1]} : vector<8x15xf32> to vector<8x1xf32>
    %77 = vector.shape_cast %76 : vector<8x1xf32> to vector<8x1xf32>
    %78 = vector.broadcast %77 : vector<8x1xf32> to vector<8x256xf32>
    %79 = arith.select %75, %78, %65 : vector<8x256xi1>, vector<8x256xf32>
    %80 = vector.extract_strided_slice %2 {offsets = [0, 4], sizes = [8, 1], strides = [1, 1]} : vector<8x15xf32> to vector<8x1xf32>
    %81 = vector.shape_cast %80 : vector<8x1xf32> to vector<8x1xf32>
    %82 = vector.broadcast %81 : vector<8x1xf32> to vector<8x256xf32>
    %83 = arith.select %75, %82, %69 : vector<8x256xi1>, vector<8x256xf32>
    %84 = vector.extract_strided_slice %3 {offsets = [0, 4], sizes = [8, 1], strides = [1, 1]} : vector<8x15xf32> to vector<8x1xf32>
    %85 = vector.shape_cast %84 : vector<8x1xf32> to vector<8x1xf32>
    %86 = vector.broadcast %85 : vector<8x1xf32> to vector<8x256xf32>
    %87 = arith.select %75, %86, %73 : vector<8x256xi1>, vector<8x256xf32>
    %c5_i32 = arith.constant 5 : i32
    %88 = vector.broadcast %c5_i32 : i32 to vector<8x256xi32>
    %89 = arith.cmpi eq, %17, %88 : vector<8x256xi32>
    %90 = vector.extract_strided_slice %1 {offsets = [0, 5], sizes = [8, 1], strides = [1, 1]} : vector<8x15xf32> to vector<8x1xf32>
    %91 = vector.shape_cast %90 : vector<8x1xf32> to vector<8x1xf32>
    %92 = vector.broadcast %91 : vector<8x1xf32> to vector<8x256xf32>
    %93 = arith.select %89, %92, %79 : vector<8x256xi1>, vector<8x256xf32>
    %94 = vector.extract_strided_slice %2 {offsets = [0, 5], sizes = [8, 1], strides = [1, 1]} : vector<8x15xf32> to vector<8x1xf32>
    %95 = vector.shape_cast %94 : vector<8x1xf32> to vector<8x1xf32>
    %96 = vector.broadcast %95 : vector<8x1xf32> to vector<8x256xf32>
    %97 = arith.select %89, %96, %83 : vector<8x256xi1>, vector<8x256xf32>
    %98 = vector.extract_strided_slice %3 {offsets = [0, 5], sizes = [8, 1], strides = [1, 1]} : vector<8x15xf32> to vector<8x1xf32>
    %99 = vector.shape_cast %98 : vector<8x1xf32> to vector<8x1xf32>
    %100 = vector.broadcast %99 : vector<8x1xf32> to vector<8x256xf32>
    %101 = arith.select %89, %100, %87 : vector<8x256xi1>, vector<8x256xf32>
    %c6_i32 = arith.constant 6 : i32
    %102 = vector.broadcast %c6_i32 : i32 to vector<8x256xi32>
    %103 = arith.cmpi eq, %17, %102 : vector<8x256xi32>
    %104 = vector.extract_strided_slice %1 {offsets = [0, 6], sizes = [8, 1], strides = [1, 1]} : vector<8x15xf32> to vector<8x1xf32>
    %105 = vector.shape_cast %104 : vector<8x1xf32> to vector<8x1xf32>
    %106 = vector.broadcast %105 : vector<8x1xf32> to vector<8x256xf32>
    %107 = arith.select %103, %106, %93 : vector<8x256xi1>, vector<8x256xf32>
    %108 = vector.extract_strided_slice %2 {offsets = [0, 6], sizes = [8, 1], strides = [1, 1]} : vector<8x15xf32> to vector<8x1xf32>
    %109 = vector.shape_cast %108 : vector<8x1xf32> to vector<8x1xf32>
    %110 = vector.broadcast %109 : vector<8x1xf32> to vector<8x256xf32>
    %111 = arith.select %103, %110, %97 : vector<8x256xi1>, vector<8x256xf32>
    %112 = vector.extract_strided_slice %3 {offsets = [0, 6], sizes = [8, 1], strides = [1, 1]} : vector<8x15xf32> to vector<8x1xf32>
    %113 = vector.shape_cast %112 : vector<8x1xf32> to vector<8x1xf32>
    %114 = vector.broadcast %113 : vector<8x1xf32> to vector<8x256xf32>
    %115 = arith.select %103, %114, %101 : vector<8x256xi1>, vector<8x256xf32>
    %c7_i32 = arith.constant 7 : i32
    %116 = vector.broadcast %c7_i32 : i32 to vector<8x256xi32>
    %117 = arith.cmpi eq, %17, %116 : vector<8x256xi32>
    %118 = vector.extract_strided_slice %1 {offsets = [0, 7], sizes = [8, 1], strides = [1, 1]} : vector<8x15xf32> to vector<8x1xf32>
    %119 = vector.shape_cast %118 : vector<8x1xf32> to vector<8x1xf32>
    %120 = vector.broadcast %119 : vector<8x1xf32> to vector<8x256xf32>
    %121 = arith.select %117, %120, %107 : vector<8x256xi1>, vector<8x256xf32>
    %122 = vector.extract_strided_slice %2 {offsets = [0, 7], sizes = [8, 1], strides = [1, 1]} : vector<8x15xf32> to vector<8x1xf32>
    %123 = vector.shape_cast %122 : vector<8x1xf32> to vector<8x1xf32>
    %124 = vector.broadcast %123 : vector<8x1xf32> to vector<8x256xf32>
    %125 = arith.select %117, %124, %111 : vector<8x256xi1>, vector<8x256xf32>
    %126 = vector.extract_strided_slice %3 {offsets = [0, 7], sizes = [8, 1], strides = [1, 1]} : vector<8x15xf32> to vector<8x1xf32>
    %127 = vector.shape_cast %126 : vector<8x1xf32> to vector<8x1xf32>
    %128 = vector.broadcast %127 : vector<8x1xf32> to vector<8x256xf32>
    %129 = arith.select %117, %128, %115 : vector<8x256xi1>, vector<8x256xf32>
    %c8_i32 = arith.constant 8 : i32
    %130 = vector.broadcast %c8_i32 : i32 to vector<8x256xi32>
    %131 = arith.cmpi eq, %17, %130 : vector<8x256xi32>
    %132 = vector.extract_strided_slice %1 {offsets = [0, 8], sizes = [8, 1], strides = [1, 1]} : vector<8x15xf32> to vector<8x1xf32>
    %133 = vector.shape_cast %132 : vector<8x1xf32> to vector<8x1xf32>
    %134 = vector.broadcast %133 : vector<8x1xf32> to vector<8x256xf32>
    %135 = arith.select %131, %134, %121 : vector<8x256xi1>, vector<8x256xf32>
    %136 = vector.extract_strided_slice %2 {offsets = [0, 8], sizes = [8, 1], strides = [1, 1]} : vector<8x15xf32> to vector<8x1xf32>
    %137 = vector.shape_cast %136 : vector<8x1xf32> to vector<8x1xf32>
    %138 = vector.broadcast %137 : vector<8x1xf32> to vector<8x256xf32>
    %139 = arith.select %131, %138, %125 : vector<8x256xi1>, vector<8x256xf32>
    %140 = vector.extract_strided_slice %3 {offsets = [0, 8], sizes = [8, 1], strides = [1, 1]} : vector<8x15xf32> to vector<8x1xf32>
    %141 = vector.shape_cast %140 : vector<8x1xf32> to vector<8x1xf32>
    %142 = vector.broadcast %141 : vector<8x1xf32> to vector<8x256xf32>
    %143 = arith.select %131, %142, %129 : vector<8x256xi1>, vector<8x256xf32>
    %c9_i32 = arith.constant 9 : i32
    %144 = vector.broadcast %c9_i32 : i32 to vector<8x256xi32>
    %145 = arith.cmpi eq, %17, %144 : vector<8x256xi32>
    %146 = vector.extract_strided_slice %1 {offsets = [0, 9], sizes = [8, 1], strides = [1, 1]} : vector<8x15xf32> to vector<8x1xf32>
    %147 = vector.shape_cast %146 : vector<8x1xf32> to vector<8x1xf32>
    %148 = vector.broadcast %147 : vector<8x1xf32> to vector<8x256xf32>
    %149 = arith.select %145, %148, %135 : vector<8x256xi1>, vector<8x256xf32>
    %150 = vector.extract_strided_slice %2 {offsets = [0, 9], sizes = [8, 1], strides = [1, 1]} : vector<8x15xf32> to vector<8x1xf32>
    %151 = vector.shape_cast %150 : vector<8x1xf32> to vector<8x1xf32>
    %152 = vector.broadcast %151 : vector<8x1xf32> to vector<8x256xf32>
    %153 = arith.select %145, %152, %139 : vector<8x256xi1>, vector<8x256xf32>
    %154 = vector.extract_strided_slice %3 {offsets = [0, 9], sizes = [8, 1], strides = [1, 1]} : vector<8x15xf32> to vector<8x1xf32>
    %155 = vector.shape_cast %154 : vector<8x1xf32> to vector<8x1xf32>
    %156 = vector.broadcast %155 : vector<8x1xf32> to vector<8x256xf32>
    %157 = arith.select %145, %156, %143 : vector<8x256xi1>, vector<8x256xf32>
    %c10_i32 = arith.constant 10 : i32
    %158 = vector.broadcast %c10_i32 : i32 to vector<8x256xi32>
    %159 = arith.cmpi eq, %17, %158 : vector<8x256xi32>
    %160 = vector.extract_strided_slice %1 {offsets = [0, 10], sizes = [8, 1], strides = [1, 1]} : vector<8x15xf32> to vector<8x1xf32>
    %161 = vector.shape_cast %160 : vector<8x1xf32> to vector<8x1xf32>
    %162 = vector.broadcast %161 : vector<8x1xf32> to vector<8x256xf32>
    %163 = arith.select %159, %162, %149 : vector<8x256xi1>, vector<8x256xf32>
    %164 = vector.extract_strided_slice %2 {offsets = [0, 10], sizes = [8, 1], strides = [1, 1]} : vector<8x15xf32> to vector<8x1xf32>
    %165 = vector.shape_cast %164 : vector<8x1xf32> to vector<8x1xf32>
    %166 = vector.broadcast %165 : vector<8x1xf32> to vector<8x256xf32>
    %167 = arith.select %159, %166, %153 : vector<8x256xi1>, vector<8x256xf32>
    %168 = vector.extract_strided_slice %3 {offsets = [0, 10], sizes = [8, 1], strides = [1, 1]} : vector<8x15xf32> to vector<8x1xf32>
    %169 = vector.shape_cast %168 : vector<8x1xf32> to vector<8x1xf32>
    %170 = vector.broadcast %169 : vector<8x1xf32> to vector<8x256xf32>
    %171 = arith.select %159, %170, %157 : vector<8x256xi1>, vector<8x256xf32>
    %c11_i32 = arith.constant 11 : i32
    %172 = vector.broadcast %c11_i32 : i32 to vector<8x256xi32>
    %173 = arith.cmpi eq, %17, %172 : vector<8x256xi32>
    %174 = vector.extract_strided_slice %1 {offsets = [0, 11], sizes = [8, 1], strides = [1, 1]} : vector<8x15xf32> to vector<8x1xf32>
    %175 = vector.shape_cast %174 : vector<8x1xf32> to vector<8x1xf32>
    %176 = vector.broadcast %175 : vector<8x1xf32> to vector<8x256xf32>
    %177 = arith.select %173, %176, %163 : vector<8x256xi1>, vector<8x256xf32>
    %178 = vector.extract_strided_slice %2 {offsets = [0, 11], sizes = [8, 1], strides = [1, 1]} : vector<8x15xf32> to vector<8x1xf32>
    %179 = vector.shape_cast %178 : vector<8x1xf32> to vector<8x1xf32>
    %180 = vector.broadcast %179 : vector<8x1xf32> to vector<8x256xf32>
    %181 = arith.select %173, %180, %167 : vector<8x256xi1>, vector<8x256xf32>
    %182 = vector.extract_strided_slice %3 {offsets = [0, 11], sizes = [8, 1], strides = [1, 1]} : vector<8x15xf32> to vector<8x1xf32>
    %183 = vector.shape_cast %182 : vector<8x1xf32> to vector<8x1xf32>
    %184 = vector.broadcast %183 : vector<8x1xf32> to vector<8x256xf32>
    %185 = arith.select %173, %184, %171 : vector<8x256xi1>, vector<8x256xf32>
    %c12_i32 = arith.constant 12 : i32
    %186 = vector.broadcast %c12_i32 : i32 to vector<8x256xi32>
    %187 = arith.cmpi eq, %17, %186 : vector<8x256xi32>
    %188 = vector.extract_strided_slice %1 {offsets = [0, 12], sizes = [8, 1], strides = [1, 1]} : vector<8x15xf32> to vector<8x1xf32>
    %189 = vector.shape_cast %188 : vector<8x1xf32> to vector<8x1xf32>
    %190 = vector.broadcast %189 : vector<8x1xf32> to vector<8x256xf32>
    %191 = arith.select %187, %190, %177 : vector<8x256xi1>, vector<8x256xf32>
    %192 = vector.extract_strided_slice %2 {offsets = [0, 12], sizes = [8, 1], strides = [1, 1]} : vector<8x15xf32> to vector<8x1xf32>
    %193 = vector.shape_cast %192 : vector<8x1xf32> to vector<8x1xf32>
    %194 = vector.broadcast %193 : vector<8x1xf32> to vector<8x256xf32>
    %195 = arith.select %187, %194, %181 : vector<8x256xi1>, vector<8x256xf32>
    %196 = vector.extract_strided_slice %3 {offsets = [0, 12], sizes = [8, 1], strides = [1, 1]} : vector<8x15xf32> to vector<8x1xf32>
    %197 = vector.shape_cast %196 : vector<8x1xf32> to vector<8x1xf32>
    %198 = vector.broadcast %197 : vector<8x1xf32> to vector<8x256xf32>
    %199 = arith.select %187, %198, %185 : vector<8x256xi1>, vector<8x256xf32>
    %c13_i32 = arith.constant 13 : i32
    %200 = vector.broadcast %c13_i32 : i32 to vector<8x256xi32>
    %201 = arith.cmpi eq, %17, %200 : vector<8x256xi32>
    %202 = vector.extract_strided_slice %1 {offsets = [0, 13], sizes = [8, 1], strides = [1, 1]} : vector<8x15xf32> to vector<8x1xf32>
    %203 = vector.shape_cast %202 : vector<8x1xf32> to vector<8x1xf32>
    %204 = vector.broadcast %203 : vector<8x1xf32> to vector<8x256xf32>
    %205 = arith.select %201, %204, %191 : vector<8x256xi1>, vector<8x256xf32>
    %206 = vector.extract_strided_slice %2 {offsets = [0, 13], sizes = [8, 1], strides = [1, 1]} : vector<8x15xf32> to vector<8x1xf32>
    %207 = vector.shape_cast %206 : vector<8x1xf32> to vector<8x1xf32>
    %208 = vector.broadcast %207 : vector<8x1xf32> to vector<8x256xf32>
    %209 = arith.select %201, %208, %195 : vector<8x256xi1>, vector<8x256xf32>
    %210 = vector.extract_strided_slice %3 {offsets = [0, 13], sizes = [8, 1], strides = [1, 1]} : vector<8x15xf32> to vector<8x1xf32>
    %211 = vector.shape_cast %210 : vector<8x1xf32> to vector<8x1xf32>
    %212 = vector.broadcast %211 : vector<8x1xf32> to vector<8x256xf32>
    %213 = arith.select %201, %212, %199 : vector<8x256xi1>, vector<8x256xf32>
    %c14_i32_12 = arith.constant 14 : i32
    %214 = vector.broadcast %c14_i32_12 : i32 to vector<8x256xi32>
    %215 = arith.cmpi eq, %17, %214 : vector<8x256xi32>
    %216 = vector.extract_strided_slice %1 {offsets = [0, 14], sizes = [8, 1], strides = [1, 1]} : vector<8x15xf32> to vector<8x1xf32>
    %217 = vector.shape_cast %216 : vector<8x1xf32> to vector<8x1xf32>
    %218 = vector.broadcast %217 : vector<8x1xf32> to vector<8x256xf32>
    %219 = arith.select %215, %218, %205 : vector<8x256xi1>, vector<8x256xf32>
    %220 = vector.extract_strided_slice %2 {offsets = [0, 14], sizes = [8, 1], strides = [1, 1]} : vector<8x15xf32> to vector<8x1xf32>
    %221 = vector.shape_cast %220 : vector<8x1xf32> to vector<8x1xf32>
    %222 = vector.broadcast %221 : vector<8x1xf32> to vector<8x256xf32>
    %223 = arith.select %215, %222, %209 : vector<8x256xi1>, vector<8x256xf32>
    %224 = vector.extract_strided_slice %3 {offsets = [0, 14], sizes = [8, 1], strides = [1, 1]} : vector<8x15xf32> to vector<8x1xf32>
    %225 = vector.shape_cast %224 : vector<8x1xf32> to vector<8x1xf32>
    %226 = vector.broadcast %225 : vector<8x1xf32> to vector<8x256xf32>
    %227 = arith.select %215, %226, %213 : vector<8x256xi1>, vector<8x256xf32>
    %228 = arith.mulf %227, %22 : vector<8x256xf32>
    %229 = arith.addf %228, %223 : vector<8x256xf32>
    %230 = arith.mulf %229, %22 : vector<8x256xf32>
    %231 = arith.addf %230, %219 : vector<8x256xf32>
    %c0_13 = arith.constant 0 : index
    %c0_14 = arith.constant 0 : index
    %232 = vector.load %arg6[%c0_13, %c0_14] : memref<8x256xf32, #tpu.memory_space<vmem>>, vector<8x256xf32>
    tpu.vector_store %arg6[%c0_13, %c0_14], %231 {strides = array<i32>} : memref<8x256xf32, #tpu.memory_space<vmem>>, vector<8x256xf32>,
    return
  }
  func.func @transform_0(%arg0: i32, %arg1: i32) -> (i32, i32) {
    %c0_i32 = arith.constant 0 : i32
    return %arg0, %arg1 : i32, i32
  }
  func.func @transform_1(%arg0: i32, %arg1: i32) -> (i32, i32) {
    %c0_i32 = arith.constant 0 : i32
    %c0_i32_0 = arith.constant 0 : i32
    return %arg0, %c0_i32 : i32, i32
  }
  func.func @transform_2(%arg0: i32, %arg1: i32) -> (i32, i32) {
    %c0_i32 = arith.constant 0 : i32
    %c0_i32_0 = arith.constant 0 : i32
    return %arg0, %c0_i32 : i32, i32
  }
  func.func @transform_3(%arg0: i32, %arg1: i32) -> (i32, i32) {
    %c0_i32 = arith.constant 0 : i32
    %c0_i32_0 = arith.constant 0 : i32
    return %arg0, %c0_i32 : i32, i32
  }
  func.func @transform_4(%arg0: i32, %arg1: i32) -> (i32, i32) {
    %c0_i32 = arith.constant 0 : i32
    return %arg0, %arg1 : i32, i32
  }
}

</mosaic_0001>

<llo_original>
// kernel: tpu_custom_call.1
$region0: #{tpu_custom_call.1}
  #allocation0 [shape = 'u32[]', space=smem, size = 0x4, offset = 0x4, fixed_abs, tag = 'smem constant byte address 0x4 - core index']
  #allocation1 [shape = 'u32[72,128]{1,0:T(1,128)}', space=vmem, size = 0x9000, scoped, tag = 'internal scratch']
  %s0 = inlined_call_operand.hbm [shape: f32[8,256], index: 0, kind: input, shape index: {}]
  %s1 = inlined_call_operand.hbm [shape: f32[8,15], index: 1, kind: input, shape index: {}]
  %s2 = inlined_call_operand.hbm [shape: f32[8,15], index: 2, kind: input, shape index: {}]
  %s3 = inlined_call_operand.hbm [shape: f32[8,15], index: 3, kind: input, shape index: {}]
  %s4 = inlined_call_operand.hbm [shape: f32[8,256], index: 4, kind: output, shape index: {}]
  %s5 = sld [smem:[#allocation0]]
  $region42: #{tpu_custom_call.1} parent=0
    _
  %s7 = ssub.s32 1, %s5
  %s8 = scalar_select 0, %s7, %s5
  $region1: #{tpu_custom_call.1} parent=0
    #allocation2 [shape = 'u8[8192]{0}', space=vmem, size = 0x2000, scoped, tag = 'input window, operand 0, single buffered']
    #allocation3 [shape = 's32[1]{0}', space=sflag, size = 0x4, scoped, tag = 'scoped memory for tpu_custom_call.1']
    #allocation4 [shape = 's32[1]{0}', space=sflag, size = 0x4, scoped, tag = 'scoped memory for tpu_custom_call.1']
    #allocation5 [shape = 'u8[4096]{0}', space=vmem, size = 0x1000, scoped, tag = 'input window, operand 1, single buffered']
    #allocation6 [shape = 's32[1]{0}', space=sflag, size = 0x4, scoped, tag = 'scoped memory for tpu_custom_call.1']
    #allocation7 [shape = 'u8[4096]{0}', space=vmem, size = 0x1000, scoped, tag = 'input window, operand 2, single buffered']
    #allocation8 [shape = 'u8[4096]{0}', space=vmem, size = 0x1000, scoped, tag = 'input window, operand 3, single buffered']
    #allocation9 [shape = 's32[1]{0}', space=sflag, size = 0x4, scoped, tag = 'scoped memory for tpu_custom_call.1']
    #allocation10 [shape = 'u8[8192]{0}', space=vmem, size = 0x2000, scoped, tag = 'output window, operand 0, single buffered']
    %9 = vsyncpa [#allocation3], 0
    %10 = vsyncpa [#allocation6], 0
    %11 = vsyncpa [#allocation9], 0
    %12 = vsyncpa [#allocation4], 0
    // Predicated region
    $region2: #{tpu_custom_call.1} parent=1 // pred_check
      _
    $region3: #{tpu_custom_call.1} parent=1 // pred_check_branch
      %14 = sbr.rel (0) target = $region5
    $region4: #{tpu_custom_call.1} parent=1 // pred_region
      %16 = vsyncadd [#allocation3], 0
      %s18 = sshll.u32 %s0, 4
      %s19 = int_to_ptr.hbm [resolvable:$true] %s18
      %s20 = sshll.u32 [#allocation2], 4
      %s21 = int_to_ptr.vmem [resolvable:$true] %s20
      %23 = dma.hbm_to_vmem [thread:$0]  %s19, 256, %s21, [#allocation3]
    $region5: #{tpu_custom_call.1} parent=1 // pred_fallthru
      _
    // Predicated region
    $region6: #{tpu_custom_call.1} parent=1 // pred_check
      _
    $region7: #{tpu_custom_call.1} parent=1 // pred_check_branch
      %25 = sbr.rel (0) target = $region9
    $region8: #{tpu_custom_call.1} parent=1 // pred_region
      %27 = vsyncadd [#allocation6], 0
      %s29 = sshll.u32 %s1, 4
      %s30 = int_to_ptr.hbm [resolvable:$true] %s29
      %s31 = sshll.u32 [#allocation5], 4
      %s32 = int_to_ptr.vmem [resolvable:$true] %s31
      %34 = dma.hbm_to_vmem [thread:$0]  %s30, 128, %s32, [#allocation6]
    $region9: #{tpu_custom_call.1} parent=1 // pred_fallthru
      _
    // Predicated region
    $region10: #{tpu_custom_call.1} parent=1 // pred_check
      _
    $region11: #{tpu_custom_call.1} parent=1 // pred_check_branch
      %36 = sbr.rel (0) target = $region13
    $region12: #{tpu_custom_call.1} parent=1 // pred_region
      %38 = vsyncadd [#allocation6], 0
      %s40 = sshll.u32 %s2, 4
      %s41 = int_to_ptr.hbm [resolvable:$true] %s40
      %s42 = sshll.u32 [#allocation7], 4
      %s43 = int_to_ptr.vmem [resolvable:$true] %s42
      %45 = dma.hbm_to_vmem [thread:$0]  %s41, 128, %s43, [#allocation6]
    $region13: #{tpu_custom_call.1} parent=1 // pred_fallthru
      _
    // Predicated region
    $region14: #{tpu_custom_call.1} parent=1 // pred_check
      _
    $region15: #{tpu_custom_call.1} parent=1 // pred_check_branch
      %47 = sbr.rel (0) target = $region17
    $region16: #{tpu_custom_call.1} parent=1 // pred_region
      %49 = vsyncadd [#allocation9], 0
      %s51 = sshll.u32 %s3, 4
      %s52 = int_to_ptr.hbm [resolvable:$true] %s51
      %s53 = sshll.u32 [#allocation8], 4
      %s54 = int_to_ptr.vmem [resolvable:$true] %s53
      %56 = dma.hbm_to_vmem [thread:$0]  %s52, 128, %s54, [#allocation9]
    $region17: #{tpu_custom_call.1} parent=1 // pred_fallthru
      _
    // Predicated region
    $region18: #{tpu_custom_call.1} parent=1 // pred_check
      _
    $region19: #{tpu_custom_call.1} parent=1 // pred_check_branch
      %58 = sbr.rel (0) target = $region21
    $region20: #{tpu_custom_call.1} parent=1 // pred_region
      %60 = dma.done [#allocation3], 256
    $region21: #{tpu_custom_call.1} parent=1 // pred_fallthru
      _
    // Predicated region
    $region22: #{tpu_custom_call.1} parent=1 // pred_check
      _
    $region23: #{tpu_custom_call.1} parent=1 // pred_check_branch
      %62 = sbr.rel (0) target = $region25
    $region24: #{tpu_custom_call.1} parent=1 // pred_region
      %64 = dma.done [#allocation6], 128
    $region25: #{tpu_custom_call.1} parent=1 // pred_fallthru
      _
    // Predicated region
    $region26: #{tpu_custom_call.1} parent=1 // pred_check
      _
    $region27: #{tpu_custom_call.1} parent=1 // pred_check_branch
      %66 = sbr.rel (0) target = $region29
    $region28: #{tpu_custom_call.1} parent=1 // pred_region
      %68 = dma.done [#allocation6], 128
    $region29: #{tpu_custom_call.1} parent=1 // pred_fallthru
      _
    // Predicated region
    $region30: #{tpu_custom_call.1} parent=1 // pred_check
      _
    $region31: #{tpu_custom_call.1} parent=1 // pred_check_branch
      %70 = sbr.rel (0) target = $region33
    $region32: #{tpu_custom_call.1} parent=1 // pred_region
      %72 = dma.done [#allocation9], 128
    $region33: #{tpu_custom_call.1} parent=1 // pred_fallthru
      _
    %v73 = vld [vmem:[#allocation2] sm:$0xff]
    %v74 = vld [vmem:[#allocation2 + $0x8] sm:$0xff]
    %v75 = vld [vmem:[#allocation5] sm:$0xff]
    %v76 = vld [vmem:[#allocation7] sm:$0xff]
    %v77 = vld [vmem:[#allocation8] sm:$0xff]
    %v78 = vmax.f32 %v73, -4.0
    %v79 = vmax.f32 %v74, -4.0
    %v80 = vmin.f32 %v78, 3.0
    %v81 = vmin.f32 %v79, 3.0
    %v82 = vrcp.pop 0.5
    %v83 = vmul.f32 0.5, %v82
    %v84 = vsub.f32 1.0, %v83
    %v85 = vmul.f32 %v82, %v84
    %v86 = vadd.f32 %v82, %v85
    %vm87 = vweird.f32 %v82
    %v88 = vsel %vm87, %v82, %v86
    %v89 = vmul.f32 %v80, %v88
    %v90 = vmul.f32 %v81, %v88
    %v91 = vfloor.f32 %v89
    %v92 = vfloor.f32 %v90
    %v93 = vadd.f32 %v91, 8.0
    %v94 = vadd.f32 %v92, 8.0
    %v95 = vcvt.f32.s32.to.zero.pseudo %v93
    %v96 = vcvt.f32.s32.to.zero.pseudo %v94
    %vm97 = vcmp.gt.s32.totalorder %v95, 0
    %v98 = vsel %vm97, %v95, 0
    %vm99 = vcmp.gt.s32.totalorder %v96, 0
    %v100 = vsel %vm99, %v96, 0
    %vm101 = vcmp.lt.s32.totalorder %v98, 14
    %v102 = vsel %vm101, %v98, 14
    %vm103 = vcmp.lt.s32.totalorder %v100, 14
    %v104 = vsel %vm103, %v100, 14
    %v105 = vmul.f32 %v91, 0.5
    %v106 = vmul.f32 %v92, 0.5
    %v107 = vsub.f32 %v73, %v105
    %v108 = vsub.f32 %v74, %v106
    %v109 = vmul.f32 %v107, 2.0
    %v110 = vmul.f32 %v108, 2.0
    %112 = vset.pattern.permute.xlu0 0
    %113 = vperm.xlu0 %112, %v75
    %v114 = vpop.permute.xlu0 %113
    %117 = vset.pattern.permute.xlu0 0
    %118 = vperm.xlu0 %117, %v76
    %v119 = vpop.permute.xlu0 %118
    %122 = vset.pattern.permute.xlu0 0
    %123 = vperm.xlu0 %122, %v77
    %v124 = vpop.permute.xlu0 %123
    %vm126 = vcmp.eq.s32.totalorder %v102, 1
    %vm127 = vcmp.eq.s32.totalorder %v104, 1
    %128 = vset.pattern.permute.xlu0 1
    %129 = vperm.xlu0 %128, %v75
    %v130 = vpop.permute.xlu0 %129
    %v132 = vsel %vm126, %v130, %v114
    %v133 = vsel %vm127, %v130, %v114
    %134 = vset.pattern.permute.xlu0 1
    %135 = vperm.xlu0 %134, %v76
    %v136 = vpop.permute.xlu0 %135
    %v138 = vsel %vm126, %v136, %v119
    %v139 = vsel %vm127, %v136, %v119
    %140 = vset.pattern.permute.xlu0 1
    %141 = vperm.xlu0 %140, %v77
    %v142 = vpop.permute.xlu0 %141
    %v144 = vsel %vm126, %v142, %v124
    %v145 = vsel %vm127, %v142, %v124
    %vm146 = vcmp.eq.s32.totalorder %v102, 2
    %vm147 = vcmp.eq.s32.totalorder %v104, 2
    %148 = vset.pattern.permute.xlu0 2
    %149 = vperm.xlu0 %148, %v75
    %v150 = vpop.permute.xlu0 %149
    %v152 = vsel %vm146, %v150, %v132
    %v153 = vsel %vm147, %v150, %v133
    %154 = vset.pattern.permute.xlu0 2
    %155 = vperm.xlu0 %154, %v76
    %v156 = vpop.permute.xlu0 %155
    %v158 = vsel %vm146, %v156, %v138
    %v159 = vsel %vm147, %v156, %v139
    %160 = vset.pattern.permute.xlu0 2
    %161 = vperm.xlu0 %160, %v77
    %v162 = vpop.permute.xlu0 %161
    %v164 = vsel %vm146, %v162, %v144
    %v165 = vsel %vm147, %v162, %v145
    %vm166 = vcmp.eq.s32.totalorder %v102, 3
    %vm167 = vcmp.eq.s32.totalorder %v104, 3
    %168 = vset.pattern.permute.xlu0 3
    %169 = vperm.xlu0 %168, %v75
    %v170 = vpop.permute.xlu0 %169
    %v172 = vsel %vm166, %v170, %v152
    %v173 = vsel %vm167, %v170, %v153
    %174 = vset.pattern.permute.xlu0 3
    %175 = vperm.xlu0 %174, %v76
    %v176 = vpop.permute.xlu0 %175
    %v178 = vsel %vm166, %v176, %v158
    %v179 = vsel %vm167, %v176, %v159
    %180 = vset.pattern.permute.xlu0 3
    %181 = vperm.xlu0 %180, %v77
    %v182 = vpop.permute.xlu0 %181
    %v184 = vsel %vm166, %v182, %v164
    %v185 = vsel %vm167, %v182, %v165
    %vm186 = vcmp.eq.s32.totalorder %v102, 4
    %vm187 = vcmp.eq.s32.totalorder %v104, 4
    %188 = vset.pattern.permute.xlu0 4
    %189 = vperm.xlu0 %188, %v75
    %v190 = vpop.permute.xlu0 %189
    %v192 = vsel %vm186, %v190, %v172
    %v193 = vsel %vm187, %v190, %v173
    %194 = vset.pattern.permute.xlu0 4
    %195 = vperm.xlu0 %194, %v76
    %v196 = vpop.permute.xlu0 %195
    %v198 = vsel %vm186, %v196, %v178
    %v199 = vsel %vm187, %v196, %v179
    %200 = vset.pattern.permute.xlu0 4
    %201 = vperm.xlu0 %200, %v77
    %v202 = vpop.permute.xlu0 %201
    %v204 = vsel %vm186, %v202, %v184
    %v205 = vsel %vm187, %v202, %v185
    %vm206 = vcmp.eq.s32.totalorder %v102, 5
    %vm207 = vcmp.eq.s32.totalorder %v104, 5
    %208 = vset.pattern.permute.xlu0 5
    %209 = vperm.xlu0 %208, %v75
    %v210 = vpop.permute.xlu0 %209
    %v212 = vsel %vm206, %v210, %v192
    %v213 = vsel %vm207, %v210, %v193
    %214 = vset.pattern.permute.xlu0 5
    %215 = vperm.xlu0 %214, %v76
    %v216 = vpop.permute.xlu0 %215
    %v218 = vsel %vm206, %v216, %v198
    %v219 = vsel %vm207, %v216, %v199
    %220 = vset.pattern.permute.xlu0 5
    %221 = vperm.xlu0 %220, %v77
    %v222 = vpop.permute.xlu0 %221
    %v224 = vsel %vm206, %v222, %v204
    %v225 = vsel %vm207, %v222, %v205
    %vm226 = vcmp.eq.s32.totalorder %v102, 6
    %vm227 = vcmp.eq.s32.totalorder %v104, 6
    %228 = vset.pattern.permute.xlu0 6
    %229 = vperm.xlu0 %228, %v75
    %v230 = vpop.permute.xlu0 %229
    %v232 = vsel %vm226, %v230, %v212
    %v233 = vsel %vm227, %v230, %v213
    %234 = vset.pattern.permute.xlu0 6
    %235 = vperm.xlu0 %234, %v76
    %v236 = vpop.permute.xlu0 %235
    %v238 = vsel %vm226, %v236, %v218
    %v239 = vsel %vm227, %v236, %v219
    %240 = vset.pattern.permute.xlu0 6
    %241 = vperm.xlu0 %240, %v77
    %v242 = vpop.permute.xlu0 %241
    %v244 = vsel %vm226, %v242, %v224
    %v245 = vsel %vm227, %v242, %v225
    %vm246 = vcmp.eq.s32.totalorder %v102, 7
    %vm247 = vcmp.eq.s32.totalorder %v104, 7
    %248 = vset.pattern.permute.xlu0 7
    %249 = vperm.xlu0 %248, %v75
    %v250 = vpop.permute.xlu0 %249
    %v252 = vsel %vm246, %v250, %v232
    %v253 = vsel %vm247, %v250, %v233
    %254 = vset.pattern.permute.xlu0 7
    %255 = vperm.xlu0 %254, %v76
    %v256 = vpop.permute.xlu0 %255
    %v258 = vsel %vm246, %v256, %v238
    %v259 = vsel %vm247, %v256, %v239
    %260 = vset.pattern.permute.xlu0 7
    %261 = vperm.xlu0 %260, %v77
    %v262 = vpop.permute.xlu0 %261
    %v264 = vsel %vm246, %v262, %v244
    %v265 = vsel %vm247, %v262, %v245
    %vm266 = vcmp.eq.s32.totalorder %v102, 8
    %vm267 = vcmp.eq.s32.totalorder %v104, 8
    %268 = vset.pattern.permute.xlu0 8
    %269 = vperm.xlu0 %268, %v75
    %v270 = vpop.permute.xlu0 %269
    %v272 = vsel %vm266, %v270, %v252
    %v273 = vsel %vm267, %v270, %v253
    %274 = vset.pattern.permute.xlu0 8
    %275 = vperm.xlu0 %274, %v76
    %v276 = vpop.permute.xlu0 %275
    %v278 = vsel %vm266, %v276, %v258
    %v279 = vsel %vm267, %v276, %v259
    %280 = vset.pattern.permute.xlu0 8
    %281 = vperm.xlu0 %280, %v77
    %v282 = vpop.permute.xlu0 %281
    %v284 = vsel %vm266, %v282, %v264
    %v285 = vsel %vm267, %v282, %v265
    %vm286 = vcmp.eq.s32.totalorder %v102, 9
    %vm287 = vcmp.eq.s32.totalorder %v104, 9
    %288 = vset.pattern.permute.xlu0 9
    %289 = vperm.xlu0 %288, %v75
    %v290 = vpop.permute.xlu0 %289
    %v292 = vsel %vm286, %v290, %v272
    %v293 = vsel %vm287, %v290, %v273
    %294 = vset.pattern.permute.xlu0 9
    %295 = vperm.xlu0 %294, %v76
    %v296 = vpop.permute.xlu0 %295
    %v298 = vsel %vm286, %v296, %v278
    %v299 = vsel %vm287, %v296, %v279
    %300 = vset.pattern.permute.xlu0 9
    %301 = vperm.xlu0 %300, %v77
    %v302 = vpop.permute.xlu0 %301
    %v304 = vsel %vm286, %v302, %v284
    %v305 = vsel %vm287, %v302, %v285
    %vm306 = vcmp.eq.s32.totalorder %v102, 10
    %vm307 = vcmp.eq.s32.totalorder %v104, 10
    %308 = vset.pattern.permute.xlu0 10
    %309 = vperm.xlu0 %308, %v75
    %v310 = vpop.permute.xlu0 %309
    %v312 = vsel %vm306, %v310, %v292
    %v313 = vsel %vm307, %v310, %v293
    %314 = vset.pattern.permute.xlu0 10
    %315 = vperm.xlu0 %314, %v76
    %v316 = vpop.permute.xlu0 %315
    %v318 = vsel %vm306, %v316, %v298
    %v319 = vsel %vm307, %v316, %v299
    %320 = vset.pattern.permute.xlu0 10
    %321 = vperm.xlu0 %320, %v77
    %v322 = vpop.permute.xlu0 %321
    %v324 = vsel %vm306, %v322, %v304
    %v325 = vsel %vm307, %v322, %v305
    %vm326 = vcmp.eq.s32.totalorder %v102, 11
    %vm327 = vcmp.eq.s32.totalorder %v104, 11
    %328 = vset.pattern.permute.xlu0 11
    %329 = vperm.xlu0 %328, %v75
    %v330 = vpop.permute.xlu0 %329
    %v332 = vsel %vm326, %v330, %v312
    %v333 = vsel %vm327, %v330, %v313
    %334 = vset.pattern.permute.xlu0 11
    %335 = vperm.xlu0 %334, %v76
    %v336 = vpop.permute.xlu0 %335
    %v338 = vsel %vm326, %v336, %v318
    %v339 = vsel %vm327, %v336, %v319
    %340 = vset.pattern.permute.xlu0 11
    %341 = vperm.xlu0 %340, %v77
    %v342 = vpop.permute.xlu0 %341
    %v344 = vsel %vm326, %v342, %v324
    %v345 = vsel %vm327, %v342, %v325
    %vm346 = vcmp.eq.s32.totalorder %v102, 12
    %vm347 = vcmp.eq.s32.totalorder %v104, 12
    %348 = vset.pattern.permute.xlu0 12
    %349 = vperm.xlu0 %348, %v75
    %v350 = vpop.permute.xlu0 %349
    %v352 = vsel %vm346, %v350, %v332
    %v353 = vsel %vm347, %v350, %v333
    %354 = vset.pattern.permute.xlu0 12
    %355 = vperm.xlu0 %354, %v76
    %v356 = vpop.permute.xlu0 %355
    %v358 = vsel %vm346, %v356, %v338
    %v359 = vsel %vm347, %v356, %v339
    %360 = vset.pattern.permute.xlu0 12
    %361 = vperm.xlu0 %360, %v77
    %v362 = vpop.permute.xlu0 %361
    %v364 = vsel %vm346, %v362, %v344
    %v365 = vsel %vm347, %v362, %v345
    %vm366 = vcmp.eq.s32.totalorder %v102, 13
    %vm367 = vcmp.eq.s32.totalorder %v104, 13
    %368 = vset.pattern.permute.xlu0 13
    %369 = vperm.xlu0 %368, %v75
    %v370 = vpop.permute.xlu0 %369
    %v372 = vsel %vm366, %v370, %v352
    %v373 = vsel %vm367, %v370, %v353
    %374 = vset.pattern.permute.xlu0 13
    %375 = vperm.xlu0 %374, %v76
    %v376 = vpop.permute.xlu0 %375
    %v378 = vsel %vm366, %v376, %v358
    %v379 = vsel %vm367, %v376, %v359
    %380 = vset.pattern.permute.xlu0 13
    %381 = vperm.xlu0 %380, %v77
    %v382 = vpop.permute.xlu0 %381
    %v384 = vsel %vm366, %v382, %v364
    %v385 = vsel %vm367, %v382, %v365
    %vm386 = vcmp.eq.s32.totalorder %v102, 14
    %vm387 = vcmp.eq.s32.totalorder %v104, 14
    %388 = vset.pattern.permute.xlu0 14
    %389 = vperm.xlu0 %388, %v75
    %v390 = vpop.permute.xlu0 %389
    %v392 = vsel %vm386, %v390, %v372
    %v393 = vsel %vm387, %v390, %v373
    %394 = vset.pattern.permute.xlu0 14
    %395 = vperm.xlu0 %394, %v76
    %v396 = vpop.permute.xlu0 %395
    %v398 = vsel %vm386, %v396, %v378
    %v399 = vsel %vm387, %v396, %v379
    %400 = vset.pattern.permute.xlu0 14
    %401 = vperm.xlu0 %400, %v77
    %v402 = vpop.permute.xlu0 %401
    %v404 = vsel %vm386, %v402, %v384
    %v405 = vsel %vm387, %v402, %v385
    %v406 = vmul.f32 %v404, %v109
    %v407 = vmul.f32 %v405, %v110
    %v408 = vadd.f32 %v406, %v398
    %v409 = vadd.f32 %v407, %v399
    %v410 = vmul.f32 %v408, %v109
    %v411 = vmul.f32 %v409, %v110
    %v412 = vadd.f32 %v410, %v392
    %v413 = vadd.f32 %v411, %v393
    %414 = vst [vmem:[#allocation10] sm:$0xff] %v412
    %415 = vst [vmem:[#allocation10 + $0x8] sm:$0xff] %v413
    // Predicated region
    $region34: #{tpu_custom_call.1} parent=1 // pred_check
      _
    $region35: #{tpu_custom_call.1} parent=1 // pred_check_branch
      %417 = sbr.rel (0) target = $region37
    $region36: #{tpu_custom_call.1} parent=1 // pred_region
      %419 = vsyncadd [#allocation4], 0
      %s421 = sshll.u32 [#allocation10], 4
      %s422 = int_to_ptr.vmem [resolvable:$true] %s421
      %s423 = sshll.u32 %s4, 4
      %s424 = int_to_ptr.hbm [resolvable:$true] %s423
      %426 = dma.vmem_to_hbm [thread:$0]  %s422, 256, %s424, [#allocation4]
    $region37: #{tpu_custom_call.1} parent=1 // pred_fallthru
      _
    // Predicated region
    $region38: #{tpu_custom_call.1} parent=1 // pred_check
      _
    $region39: #{tpu_custom_call.1} parent=1 // pred_check_branch
      %428 = sbr.rel (0) target = $region41
    $region40: #{tpu_custom_call.1} parent=1 // pred_region
      %430 = dma.done [#allocation4], 256
    $region41: #{tpu_custom_call.1} parent=1 // pred_fallthru
      _
    %431 = vsyncpa [#allocation3], 1
    %432 = vsyncpa [#allocation6], 1
    %433 = vsyncpa [#allocation9], 1
    %434 = vsyncpa [#allocation4], 1

</llo_original>
